<compile_context>
chip_gen: v7x
topology: tpu7x:2x2x1
jax: 0.10.0
libtpu: 0.0.40
codegen_flags: <defaults>
</compile_context>

<pallas_src>
import functools

import numpy as np
import jax
import jax.numpy as jnp
from jax.experimental import pallas as pl
from jax.experimental.pallas import tpu as pltpu


class Args:
    luma_bins = 4
    batch_norm = False          # bn=False path of the PyTorch module
    num_down_layers = 2
    feature_layers = 1


# Rows per layer-1 tap block in the front-end patch matrix:
# 27 layer-0 im2col rows + 1 bias-indicator row + 4 pad rows (sublane aligned).
_K0_BLOCK = 32


def _net_dims(args, nin, nout):
    lb = args.luma_bins
    cw = 2 ** (args.num_down_layers - 1) * lb           # low-res channel width (=8)
    n_feat = args.feature_layers + 2
    dims = [(3, 3, lb), (3, lb, cw)]                     # two stride-2 down convs
    dims += [(3, cw, cw)] * n_feat                       # stride-1 feature convs
    dims += [(1, cw, lb * nin * nout)]                   # 1x1 conv_out
    return dims, cw, n_feat


def _out_hw(H, W):
    H1, W1 = (H - 1) // 2 + 1, (W - 1) // 2 + 1          # after down conv 1 (k3,s2,p1)
    H2, W2 = (H1 - 1) // 2 + 1, (W1 - 1) // 2 + 1        # after down conv 2
    return H1, W1, H2, W2


# ----------------------------------------------------------------------------
# Parameter construction: per-layer weights (PyTorch kaiming_uniform_, zero
# biases) packed into the lane-dense slabs the fused kernel consumes.
# ----------------------------------------------------------------------------
def init_coeffs_params(key, nin=2, nout=1, args=Args()):
    assert args.num_down_layers == 2 and not args.batch_norm
    dims, cw, n_feat = _net_dims(args, nin, nout)
    lb = args.luma_bins
    assert dims[-1][2] == cw, "conv_out channels must equal the low-res width"

    keys = jax.random.split(key, len(dims))
    layers = []                                          # raw weights for the reference
    for (k, cin, cout), kk in zip(dims, keys):
        fan_in = cin * k * k
        bound = float(np.sqrt(6.0 / fan_in))             # kaiming_uniform_, a=0
        w = jax.random.uniform(kk, (k * k * cin, cout), jnp.float32, -bound, bound)
        b = jnp.zeros((cout,), jnp.float32)              # PyTorch: bias.data.fill_(0.)
        layers.append((w, b))

    # Front-end weight: layer 0 replicated block-diagonally over the 9 layer-1
    # taps, with the layer-0 bias on a per-tap indicator column.
    W0 = np.asarray(layers[0][0])                        # (27, lb), row = tap0*3 + cin
    b0 = np.asarray(layers[0][1])
    w0big = np.zeros((9 * cw, 9 * _K0_BLOCK), np.float32)
    for t in range(9):
        w0big[t * cw:t * cw + lb, t * _K0_BLOCK:t * _K0_BLOCK + 27] = W0.T
        w0big[t * cw:t * cw + lb, t * _K0_BLOCK + 27] = b0

    # Remaining layers: one transposed (cw, 9*cw) block per layer (cout rows).
    w_slab = np.zeros(((2 + n_feat) * cw, 9 * cw), np.float32)
    b_slab = np.zeros((cw, 8), np.float32)

    W1 = np.asarray(layers[1][0])                        # (9*lb, cw), row = tap*lb + cin
    for t in range(9):
        w_slab[0:cw, t * cw:t * cw + lb] = W1[t * lb:(t + 1) * lb, :].T
    b_slab[:, 0] = np.asarray(layers[1][1])

    for l in range(n_feat):
        Wf = np.asarray(layers[2 + l][0])                # (9*cw, cw), row = tap*cw + cin
        w_slab[(1 + l) * cw:(2 + l) * cw, :] = Wf.T
        b_slab[:, 1 + l] = np.asarray(layers[2 + l][1])  # last feature conv: bias-free

    Wo = np.asarray(layers[2 + n_feat][0])               # (cw, cw) 1x1 conv_out
    w_slab[(1 + n_feat) * cw:(2 + n_feat) * cw, 0:cw] = Wo.T
    b_slab[:, 1 + n_feat] = np.asarray(layers[2 + n_feat][1])

    return {"w0big": jnp.asarray(w0big), "w_slab": jnp.asarray(w_slab),
            "b_slab": jnp.asarray(b_slab), "layers": layers}


# ----------------------------------------------------------------------------
# Shape-dependent (data-independent) boundary masks for the stride-1 taps
# ----------------------------------------------------------------------------
def build_coeffs_tables(B, H, W, args=Args()):
    _, _, H2, W2 = _out_hw(H, W)
    R2 = B * H2 * W2
    R2p = -(-R2 // 128) * 128                            # lane-pad rows to 128*k
    m = np.zeros((9, R2p), np.float32)
    ii = np.arange(H2)[:, None]
    jj = np.arange(W2)[None, :]
    for t in range(9):
        di, dj = t // 3 - 1, t % 3 - 1
        ok = (ii + di >= 0) & (ii + di < H2) & (jj + dj >= 0) & (jj + dj < W2)
        m[t, :R2] = np.tile(ok.reshape(-1).astype(np.float32), B)
    return {"m_feat": jnp.asarray(m)}


# ----------------------------------------------------------------------------
# Host-side (traced) prep: patch matrix for the fused stride-2 front end
# ----------------------------------------------------------------------------
def _build_front_end_patches(x_nchw, H1, W1, H2, W2, R2p):
    """(9*_K0_BLOCK, R2p) patch matrix, columns = flattened (b, i2, j2).

    Block t = layer-1 tap: the 27-element layer-0 im2col patch of the layer-0
    output position this tap reads, plus a 0/1 indicator row that gates the
    layer-0 bias.  Blocks whose layer-1 tap falls in layer-1's zero padding are
    all-zero, so they contribute exactly 0 downstream (even with nonzero bias).
    """
    B, C, H, W = x_nchw.shape
    xpad = jnp.pad(x_nchw.astype(jnp.float32), ((0, 0), (0, 0), (4, 4), (4, 4)))
    i2 = np.arange(H2)
    j2 = np.arange(W2)
    blocks = []
    for t in range(9):
        d1i, d1j = t // 3, t % 3
        i1, j1 = 2 * i2 + d1i - 1, 2 * j2 + d1j - 1
        ok = ((i1 >= 0) & (i1 < H1))[:, None] & ((j1 >= 0) & (j1 < W1))[None, :]
        valid = jnp.asarray(ok.astype(np.float32))                 # (H2, W2)
        taps = []
        for k0 in range(9):
            d0i, d0j = k0 // 3, k0 % 3
            si = 2 * d1i + d0i + 1                                  # -3 offset, +4 pad
            sj = 2 * d1j + d0j + 1
            v = jax.lax.slice(xpad, (0, 0, si, sj),
                              (B, C, si + 4 * (H2 - 1) + 1, sj + 4 * (W2 - 1) + 1),
                              (1, 1, 4, 4))                         # (B, C, H2, W2)
            taps.append(v)
        patch = jnp.stack(taps, axis=0)                             # (9, B, C, H2, W2)
        patch = jnp.transpose(patch, (0, 2, 1, 3, 4))               # (9, C, B, H2, W2)
        patch = patch.reshape(9 * C, B, H2, W2) * valid[None, None]
        ind = jnp.broadcast_to(valid[None, None], (1, B, H2, W2))
        pad_rows = jnp.zeros((_K0_BLOCK - 9 * C - 1, B, H2, W2), jnp.float32)
        blocks.append(jnp.concatenate([patch, ind, pad_rows], axis=0))
    p0 = jnp.concatenate(blocks, axis=0).reshape(9 * _K0_BLOCK, B * H2 * W2)
    return jnp.pad(p0, ((0, 0), (0, R2p - B * H2 * W2)))


# ----------------------------------------------------------------------------
# The fused Pallas kernel: whole network, activations stay in VMEM/vregs.
# Layout: activations are (cw, rows) with flattened spatial (b*H2+i)*W2+j in the
# lane (last) dimension, rows padded to a multiple of 128 (lane-dense).
# ----------------------------------------------------------------------------
def _coeffs_fused_kernel(p0_ref, w0_ref, ws_ref, b_ref, m_ref, o_ref, *,
                         W2, n_feat, compute_dtype):
    f32 = jnp.float32
    cw, R = o_ref.shape
    padw = -(-(W2 + 1) // 128) * 128                     # lane-aligned zero-pad width

    def mm(w, z):                                        # bf16/f32 operands, f32 acc
        return jnp.dot(w.astype(compute_dtype), z.astype(compute_dtype),
                       preferred_element_type=f32)

    # Fused front end: layer 0 (3x3 stride-2 conv + bias + ReLU) evaluated at all
    # 9 layer-1 tap positions with one block-diagonal matmul (M=72, K=288, N=R).
    z1 = jnp.maximum(mm(w0_ref[...], p0_ref[...]), 0.0)              # (9*cw, R)

    # Layer 1 (3x3 stride-2 conv): single fused K = 9*cw contraction.
    x = jnp.maximum(mm(ws_ref[0:cw, :], z1) + b_ref[:, 0:1], 0.0)    # (cw, R)

    # Stride-1 feature convs: the 9 taps are lane shifts of x (zero padded,
    # boundary-masked), fused into one K = 9*cw contraction per layer.
    m = m_ref[...]
    zpad = jnp.zeros((cw, padw), f32)
    for l in range(n_feat):
        xp = jnp.concatenate([zpad, x, zpad], axis=1)    # lane-aligned pieces
        taps = []
        for t in range(9):
            delta = (t // 3 - 1) * W2 + (t % 3 - 1)      # shift in flattened spatial
            taps.append(xp[:, padw + delta:padw + delta + R] * m[t:t + 1, :])
        z = jnp.concatenate(taps, axis=0)                             # (9*cw, R)
        x = jnp.maximum(mm(ws_ref[(1 + l) * cw:(2 + l) * cw, :], z)
                        + b_ref[:, 1 + l:2 + l], 0.0)

    # conv_out: 1x1, no activation.  Lane-dense (cw, R) store.
    w_out = ws_ref[(1 + n_feat) * cw:(2 + n_feat) * cw, 0:cw]
    o_ref[...] = (mm(w_out, x) + b_ref[:, 1 + n_feat:2 + n_feat]).astype(o_ref.dtype)


# ----------------------------------------------------------------------------
# Forward wrapper
# ----------------------------------------------------------------------------
def coeffs_forward(params, tables, lowres_input_nchw, nin=2, nout=1, args=Args(),
                   compute_dtype=jnp.float32):
    lb = args.luma_bins
    _, cw, n_feat = _net_dims(args, nin, nout)
    B, C, H, W = lowres_input_nchw.shape
    assert C == 3
    H1, W1, H2, W2 = _out_hw(H, W)
    R2 = B * H2 * W2
    R2p = tables["m_feat"].shape[1]
    assert R2p == -(-R2 // 128) * 128, "tables were built for a different shape"

    p0 = _build_front_end_patches(lowres_input_nchw, H1, W1, H2, W2, R2p)

    kernel = functools.partial(_coeffs_fused_kernel, W2=W2, n_feat=n_feat,
                               compute_dtype=compute_dtype)
    out = pl.pallas_call(
        kernel,
        out_shape=jax.ShapeDtypeStruct((cw, R2p), jnp.float32),
        # Whole-array VMEM blocks (no grid): resident footprint is a few hundred
        # KB here and only a few MB at production lowres sizes.
        compiler_params=pltpu.CompilerParams(vmem_limit_bytes=32 * 1024 * 1024),
    )(p0, params["w0big"], params["w_slab"], params["b_slab"], tables["m_feat"])

    # torch.stack(torch.split(x, nin*nout, 1), 2): channel c = g*(nin*nout) + m.
    o = out[:, :R2].reshape(lb, nin * nout, B, H2, W2)
    return jnp.transpose(o, (2, 1, 0, 3, 4))             # (B, nin*nout, lb, H2, W2)


# ----------------------------------------------------------------------------
# Pure-JAX (no Pallas) reference with identical semantics, for verification
# ----------------------------------------------------------------------------
def _im2col(x_nhwc, k, stride, padding):
    B, H, W, C = x_nhwc.shape
    xp = jnp.pad(x_nhwc, ((0, 0), (padding, padding), (padding, padding), (0, 0)))
    Ho = (H + 2 * padding - k) // stride + 1
    Wo = (W + 2 * padding - k) // stride + 1
    cols = [xp[:, i:i + stride * Ho:stride, j:j + stride * Wo:stride, :]
            for i in range(k) for j in range(k)]
    patches = jnp.concatenate(cols, axis=-1)
    return patches.reshape(B * Ho * Wo, k * k * C), (B, Ho, Wo)


def _conv_block_ref(x, w, b, *, k, stride, padding, relu):
    patches, (B, Ho, Wo) = _im2col(x, k, stride, padding)
    out = jnp.dot(patches, w, preferred_element_type=jnp.float32) + b[None, :]
    if relu:
        out = jnp.maximum(out, 0.0)
    return out.reshape(B, Ho, Wo, w.shape[1])


def coeffs_forward_ref(params, x_nchw, nin=2, nout=1, args=Args()):
    lb = args.luma_bins
    layers = params["layers"]
    x = jnp.transpose(x_nchw, (0, 2, 3, 1))
    for w, b in layers[:args.num_down_layers]:
        x = _conv_block_ref(x, w, b, k=3, stride=2, padding=1, relu=True)
    for w, b in layers[args.num_down_layers:-1]:
        x = _conv_block_ref(x, w, b, k=3, stride=1, padding=1, relu=True)
    w, b = layers[-1]
    x = _conv_block_ref(x, w, b, k=1, stride=1, padding=0, relu=False)
    B, Ho, Wo, _ = x.shape
    y = x.reshape(B, Ho, Wo, lb, nin * nout)
    return jnp.transpose(y, (0, 4, 3, 1, 2))


if __name__ == "__main__":
    key = jax.random.PRNGKey(0)
    pkey, xkey = jax.random.split(key)

    args = Args()
    params = init_coeffs_params(pkey, args=args)

    B, H, W = 2, 16, 16
    x = jax.random.normal(xkey, (B, 3, H, W), dtype=jnp.float32)
    tables = build_coeffs_tables(B, H, W, args=args)

    fwd_f32 = jax.jit(functools.partial(coeffs_forward, args=args))
    y = jax.block_until_ready(fwd_f32(params, tables, x))

    # nin*nout=2, luma_bins=4, two stride-2 downsamples: 16 -> 8 -> 4
    assert y.shape == (2, 2, 4, 4, 4), y.shape
    assert bool(jnp.isfinite(y).all())

    y_ref = jax.jit(functools.partial(coeffs_forward_ref, args=args))(params, x)
    # Tolerance is set by the reduced-precision default f32 matmul passes on the
    # MXU / in the XLA reference, not by the kernel's tap indexing (indexing
    # errors would be O(1)).
    np.testing.assert_allclose(np.asarray(y), np.asarray(y_ref), rtol=2e-2, atol=2e-2)

    # bf16 MXU operands with f32 accumulation (recommended on v6e / v7x).
    fwd_bf16 = jax.jit(functools.partial(coeffs_forward, args=args,
                                         compute_dtype=jnp.bfloat16))
    y16 = jax.block_until_ready(fwd_bf16(params, tables, x))
    np.testing.assert_allclose(np.asarray(y16), np.asarray(y_ref), rtol=5e-2, atol=5e-2)

    print("KERNEL_OK")
</pallas_src>

<mosaic_0001>
module attributes {stable_mosaic.version = 11 : i64} {
  func.func @_coeffs_fused_kernel(%arg0: memref<288x128xf32, #tpu.memory_space<vmem>>, %arg1: memref<72x288xf32, #tpu.memory_space<vmem>>, %arg2: memref<40x72xf32, #tpu.memory_space<vmem>>, %arg3: memref<8x8xf32, #tpu.memory_space<vmem>>, %arg4: memref<9x128xf32, #tpu.memory_space<vmem>>, %arg5: memref<8x128xf32, #tpu.memory_space<vmem>>) attributes {dimension_semantics = [], scalar_prefetch = 0 : i64, scratch_operands = 0 : i64, tpu.core_type = #tpu.core_type<tc>} {
    %c0 = arith.constant 0 : index
    %c0_0 = arith.constant 0 : index
    %0 = vector.load %arg1[%c0, %c0_0] : memref<72x288xf32, #tpu.memory_space<vmem>>, vector<72x288xf32>
    %c0_1 = arith.constant 0 : index
    %c0_2 = arith.constant 0 : index
    %1 = vector.load %arg0[%c0_1, %c0_2] : memref<288x128xf32, #tpu.memory_space<vmem>>, vector<288x128xf32>
    %cst = arith.constant dense<0.000000e+00> : vector<72x128xf32>
    %2 = tpu.matmul %0, %1, %cst {dimension_numbers = #tpu.dot_dimension_numbers<[1], [0], [0], [1], [0, 0, 1, 1], [], []>} : vector<72x288xf32>, vector<288x128xf32>, vector<72x128xf32> -> vector<72x128xf32>
    %cst_3 = arith.constant 0.000000e+00 : f32
    %3 = vector.broadcast %cst_3 : f32 to vector<72x128xf32>
    %4 = arith.maximumf %2, %3 : vector<72x128xf32>
    %c0_4 = arith.constant 0 : index
    %c0_5 = arith.constant 0 : index
    %5 = vector.load %arg2[%c0_4, %c0_5] : memref<40x72xf32, #tpu.memory_space<vmem>>, vector<8x72xf32>
    %cst_6 = arith.constant dense<0.000000e+00> : vector<8x128xf32>
    %6 = tpu.matmul %5, %4, %cst_6 {dimension_numbers = #tpu.dot_dimension_numbers<[1], [0], [0], [1], [0, 0, 1, 1], [], []>} : vector<8x72xf32>, vector<72x128xf32>, vector<8x128xf32> -> vector<8x128xf32>
    %c0_7 = arith.constant 0 : index
    %c0_8 = arith.constant 0 : index
    %7 = vector.load %arg3[%c0_7, %c0_8] : memref<8x8xf32, #tpu.memory_space<vmem>>, vector<8x1xf32>
    %8 = vector.broadcast %7 : vector<8x1xf32> to vector<8x128xf32>
    %9 = arith.addf %6, %8 : vector<8x128xf32>
    %cst_9 = arith.constant 0.000000e+00 : f32
    %10 = vector.broadcast %cst_9 : f32 to vector<8x128xf32>
    %11 = arith.maximumf %9, %10 : vector<8x128xf32>
    %c0_10 = arith.constant 0 : index
    %c0_11 = arith.constant 0 : index
    %12 = vector.load %arg4[%c0_10, %c0_11] : memref<9x128xf32, #tpu.memory_space<vmem>>, vector<9x128xf32>
    %cst_12 = arith.constant 0.000000e+00 : f32
    %13 = vector.broadcast %cst_12 : f32 to vector<8x128xf32>
    %14 = tpu.concatenate %13, %11, %13 in 1 : vector<8x128xf32>, vector<8x128xf32>, vector<8x128xf32> -> vector<8x384xf32>
    %15 = vector.extract_strided_slice %14 {offsets = [0, 123], sizes = [8, 128], strides = [1, 1]} : vector<8x384xf32> to vector<8x128xf32>
    %16 = vector.extract_strided_slice %12 {offsets = [0, 0], sizes = [1, 128], strides = [1, 1]} : vector<9x128xf32> to vector<1x128xf32>
    %17 = vector.broadcast %16 : vector<1x128xf32> to vector<8x128xf32>
    %18 = arith.mulf %15, %17 : vector<8x128xf32>
    %19 = vector.extract_strided_slice %14 {offsets = [0, 124], sizes = [8, 128], strides = [1, 1]} : vector<8x384xf32> to vector<8x128xf32>
    %20 = vector.extract_strided_slice %12 {offsets = [1, 0], sizes = [1, 128], strides = [1, 1]} : vector<9x128xf32> to vector<1x128xf32>
    %21 = vector.broadcast %20 : vector<1x128xf32> to vector<8x128xf32>
    %22 = arith.mulf %19, %21 : vector<8x128xf32>
    %23 = vector.extract_strided_slice %14 {offsets = [0, 125], sizes = [8, 128], strides = [1, 1]} : vector<8x384xf32> to vector<8x128xf32>
    %24 = vector.extract_strided_slice %12 {offsets = [2, 0], sizes = [1, 128], strides = [1, 1]} : vector<9x128xf32> to vector<1x128xf32>
    %25 = vector.broadcast %24 : vector<1x128xf32> to vector<8x128xf32>
    %26 = arith.mulf %23, %25 : vector<8x128xf32>
    %27 = vector.extract_strided_slice %14 {offsets = [0, 127], sizes = [8, 128], strides = [1, 1]} : vector<8x384xf32> to vector<8x128xf32>
    %28 = vector.extract_strided_slice %12 {offsets = [3, 0], sizes = [1, 128], strides = [1, 1]} : vector<9x128xf32> to vector<1x128xf32>
    %29 = vector.broadcast %28 : vector<1x128xf32> to vector<8x128xf32>
    %30 = arith.mulf %27, %29 : vector<8x128xf32>
    %31 = vector.extract_strided_slice %14 {offsets = [0, 128], sizes = [8, 128], strides = [1, 1]} : vector<8x384xf32> to vector<8x128xf32>
    %32 = vector.extract_strided_slice %12 {offsets = [4, 0], sizes = [1, 128], strides = [1, 1]} : vector<9x128xf32> to vector<1x128xf32>
    %33 = vector.broadcast %32 : vector<1x128xf32> to vector<8x128xf32>
    %34 = arith.mulf %31, %33 : vector<8x128xf32>
    %35 = vector.extract_strided_slice %14 {offsets = [0, 129], sizes = [8, 128], strides = [1, 1]} : vector<8x384xf32> to vector<8x128xf32>
    %36 = vector.extract_strided_slice %12 {offsets = [5, 0], sizes = [1, 128], strides = [1, 1]} : vector<9x128xf32> to vector<1x128xf32>
    %37 = vector.broadcast %36 : vector<1x128xf32> to vector<8x128xf32>
    %38 = arith.mulf %35, %37 : vector<8x128xf32>
    %39 = vector.extract_strided_slice %14 {offsets = [0, 131], sizes = [8, 128], strides = [1, 1]} : vector<8x384xf32> to vector<8x128xf32>
    %40 = vector.extract_strided_slice %12 {offsets = [6, 0], sizes = [1, 128], strides = [1, 1]} : vector<9x128xf32> to vector<1x128xf32>
    %41 = vector.broadcast %40 : vector<1x128xf32> to vector<8x128xf32>
    %42 = arith.mulf %39, %41 : vector<8x128xf32>
    %43 = vector.extract_strided_slice %14 {offsets = [0, 132], sizes = [8, 128], strides = [1, 1]} : vector<8x384xf32> to vector<8x128xf32>
    %44 = vector.extract_strided_slice %12 {offsets = [7, 0], sizes = [1, 128], strides = [1, 1]} : vector<9x128xf32> to vector<1x128xf32>
    %45 = vector.broadcast %44 : vector<1x128xf32> to vector<8x128xf32>
    %46 = arith.mulf %43, %45 : vector<8x128xf32>
    %47 = vector.extract_strided_slice %14 {offsets = [0, 133], sizes = [8, 128], strides = [1, 1]} : vector<8x384xf32> to vector<8x128xf32>
    %48 = vector.extract_strided_slice %12 {offsets = [8, 0], sizes = [1, 128], strides = [1, 1]} : vector<9x128xf32> to vector<1x128xf32>
    %49 = vector.broadcast %48 : vector<1x128xf32> to vector<8x128xf32>
    %50 = arith.mulf %47, %49 : vector<8x128xf32>
    %51 = tpu.concatenate %18, %22, %26, %30, %34, %38, %42, %46, %50 in 0 : vector<8x128xf32>, vector<8x128xf32>, vector<8x128xf32>, vector<8x128xf32>, vector<8x128xf32>, vector<8x128xf32>, vector<8x128xf32>, vector<8x128xf32>, vector<8x128xf32> -> vector<72x128xf32>
    %c8 = arith.constant 8 : index
    %c0_13 = arith.constant 0 : index
    %52 = vector.load %arg2[%c8, %c0_13] : memref<40x72xf32, #tpu.memory_space<vmem>>, vector<8x72xf32>
    %cst_14 = arith.constant dense<0.000000e+00> : vector<8x128xf32>
    %53 = tpu.matmul %52, %51, %cst_14 {dimension_numbers = #tpu.dot_dimension_numbers<[1], [0], [0], [1], [0, 0, 1, 1], [], []>} : vector<8x72xf32>, vector<72x128xf32>, vector<8x128xf32> -> vector<8x128xf32>
    %c0_15 = arith.constant 0 : index
    %c1 = arith.constant 1 : index
    %54 = vector.load %arg3[%c0_15, %c1] : memref<8x8xf32, #tpu.memory_space<vmem>>, vector<8x1xf32>
    %55 = vector.broadcast %54 : vector<8x1xf32> to vector<8x128xf32>
    %56 = arith.addf %53, %55 : vector<8x128xf32>
    %cst_16 = arith.constant 0.000000e+00 : f32
    %57 = vector.broadcast %cst_16 : f32 to vector<8x128xf32>
    %58 = arith.maximumf %56, %57 : vector<8x128xf32>
    %59 = tpu.concatenate %13, %58, %13 in 1 : vector<8x128xf32>, vector<8x128xf32>, vector<8x128xf32> -> vector<8x384xf32>
    %60 = vector.extract_strided_slice %59 {offsets = [0, 123], sizes = [8, 128], strides = [1, 1]} : vector<8x384xf32> to vector<8x128xf32>
    %61 = vector.extract_strided_slice %12 {offsets = [0, 0], sizes = [1, 128], strides = [1, 1]} : vector<9x128xf32> to vector<1x128xf32>
    %62 = vector.broadcast %61 : vector<1x128xf32> to vector<8x128xf32>
    %63 = arith.mulf %60, %62 : vector<8x128xf32>
    %64 = vector.extract_strided_slice %59 {offsets = [0, 124], sizes = [8, 128], strides = [1, 1]} : vector<8x384xf32> to vector<8x128xf32>
    %65 = vector.extract_strided_slice %12 {offsets = [1, 0], sizes = [1, 128], strides = [1, 1]} : vector<9x128xf32> to vector<1x128xf32>
    %66 = vector.broadcast %65 : vector<1x128xf32> to vector<8x128xf32>
    %67 = arith.mulf %64, %66 : vector<8x128xf32>
    %68 = vector.extract_strided_slice %59 {offsets = [0, 125], sizes = [8, 128], strides = [1, 1]} : vector<8x384xf32> to vector<8x128xf32>
    %69 = vector.extract_strided_slice %12 {offsets = [2, 0], sizes = [1, 128], strides = [1, 1]} : vector<9x128xf32> to vector<1x128xf32>
    %70 = vector.broadcast %69 : vector<1x128xf32> to vector<8x128xf32>
    %71 = arith.mulf %68, %70 : vector<8x128xf32>
    %72 = vector.extract_strided_slice %59 {offsets = [0, 127], sizes = [8, 128], strides = [1, 1]} : vector<8x384xf32> to vector<8x128xf32>
    %73 = vector.extract_strided_slice %12 {offsets = [3, 0], sizes = [1, 128], strides = [1, 1]} : vector<9x128xf32> to vector<1x128xf32>
    %74 = vector.broadcast %73 : vector<1x128xf32> to vector<8x128xf32>
    %75 = arith.mulf %72, %74 : vector<8x128xf32>
    %76 = vector.extract_strided_slice %59 {offsets = [0, 128], sizes = [8, 128], strides = [1, 1]} : vector<8x384xf32> to vector<8x128xf32>
    %77 = vector.extract_strided_slice %12 {offsets = [4, 0], sizes = [1, 128], strides = [1, 1]} : vector<9x128xf32> to vector<1x128xf32>
    %78 = vector.broadcast %77 : vector<1x128xf32> to vector<8x128xf32>
    %79 = arith.mulf %76, %78 : vector<8x128xf32>
    %80 = vector.extract_strided_slice %59 {offsets = [0, 129], sizes = [8, 128], strides = [1, 1]} : vector<8x384xf32> to vector<8x128xf32>
    %81 = vector.extract_strided_slice %12 {offsets = [5, 0], sizes = [1, 128], strides = [1, 1]} : vector<9x128xf32> to vector<1x128xf32>
    %82 = vector.broadcast %81 : vector<1x128xf32> to vector<8x128xf32>
    %83 = arith.mulf %80, %82 : vector<8x128xf32>
    %84 = vector.extract_strided_slice %59 {offsets = [0, 131], sizes = [8, 128], strides = [1, 1]} : vector<8x384xf32> to vector<8x128xf32>
    %85 = vector.extract_strided_slice %12 {offsets = [6, 0], sizes = [1, 128], strides = [1, 1]} : vector<9x128xf32> to vector<1x128xf32>
    %86 = vector.broadcast %85 : vector<1x128xf32> to vector<8x128xf32>
    %87 = arith.mulf %84, %86 : vector<8x128xf32>
    %88 = vector.extract_strided_slice %59 {offsets = [0, 132], sizes = [8, 128], strides = [1, 1]} : vector<8x384xf32> to vector<8x128xf32>
    %89 = vector.extract_strided_slice %12 {offsets = [7, 0], sizes = [1, 128], strides = [1, 1]} : vector<9x128xf32> to vector<1x128xf32>
    %90 = vector.broadcast %89 : vector<1x128xf32> to vector<8x128xf32>
    %91 = arith.mulf %88, %90 : vector<8x128xf32>
    %92 = vector.extract_strided_slice %59 {offsets = [0, 133], sizes = [8, 128], strides = [1, 1]} : vector<8x384xf32> to vector<8x128xf32>
    %93 = vector.extract_strided_slice %12 {offsets = [8, 0], sizes = [1, 128], strides = [1, 1]} : vector<9x128xf32> to vector<1x128xf32>
    %94 = vector.broadcast %93 : vector<1x128xf32> to vector<8x128xf32>
    %95 = arith.mulf %92, %94 : vector<8x128xf32>
    %96 = tpu.concatenate %63, %67, %71, %75, %79, %83, %87, %91, %95 in 0 : vector<8x128xf32>, vector<8x128xf32>, vector<8x128xf32>, vector<8x128xf32>, vector<8x128xf32>, vector<8x128xf32>, vector<8x128xf32>, vector<8x128xf32>, vector<8x128xf32> -> vector<72x128xf32>
    %c16 = arith.constant 16 : index
    %c0_17 = arith.constant 0 : index
    %97 = vector.load %arg2[%c16, %c0_17] : memref<40x72xf32, #tpu.memory_space<vmem>>, vector<8x72xf32>
    %cst_18 = arith.constant dense<0.000000e+00> : vector<8x128xf32>
    %98 = tpu.matmul %97, %96, %cst_18 {dimension_numbers = #tpu.dot_dimension_numbers<[1], [0], [0], [1], [0, 0, 1, 1], [], []>} : vector<8x72xf32>, vector<72x128xf32>, vector<8x128xf32> -> vector<8x128xf32>
    %c0_19 = arith.constant 0 : index
    %c2 = arith.constant 2 : index
    %99 = vector.load %arg3[%c0_19, %c2] : memref<8x8xf32, #tpu.memory_space<vmem>>, vector<8x1xf32>
    %100 = vector.broadcast %99 : vector<8x1xf32> to vector<8x128xf32>
    %101 = arith.addf %98, %100 : vector<8x128xf32>
    %cst_20 = arith.constant 0.000000e+00 : f32
    %102 = vector.broadcast %cst_20 : f32 to vector<8x128xf32>
    %103 = arith.maximumf %101, %102 : vector<8x128xf32>
    %104 = tpu.concatenate %13, %103, %13 in 1 : vector<8x128xf32>, vector<8x128xf32>, vector<8x128xf32> -> vector<8x384xf32>
    %105 = vector.extract_strided_slice %104 {offsets = [0, 123], sizes = [8, 128], strides = [1, 1]} : vector<8x384xf32> to vector<8x128xf32>
    %106 = vector.extract_strided_slice %12 {offsets = [0, 0], sizes = [1, 128], strides = [1, 1]} : vector<9x128xf32> to vector<1x128xf32>
    %107 = vector.broadcast %106 : vector<1x128xf32> to vector<8x128xf32>
    %108 = arith.mulf %105, %107 : vector<8x128xf32>
    %109 = vector.extract_strided_slice %104 {offsets = [0, 124], sizes = [8, 128], strides = [1, 1]} : vector<8x384xf32> to vector<8x128xf32>
    %110 = vector.extract_strided_slice %12 {offsets = [1, 0], sizes = [1, 128], strides = [1, 1]} : vector<9x128xf32> to vector<1x128xf32>
    %111 = vector.broadcast %110 : vector<1x128xf32> to vector<8x128xf32>
    %112 = arith.mulf %109, %111 : vector<8x128xf32>
    %113 = vector.extract_strided_slice %104 {offsets = [0, 125], sizes = [8, 128], strides = [1, 1]} : vector<8x384xf32> to vector<8x128xf32>
    %114 = vector.extract_strided_slice %12 {offsets = [2, 0], sizes = [1, 128], strides = [1, 1]} : vector<9x128xf32> to vector<1x128xf32>
    %115 = vector.broadcast %114 : vector<1x128xf32> to vector<8x128xf32>
    %116 = arith.mulf %113, %115 : vector<8x128xf32>
    %117 = vector.extract_strided_slice %104 {offsets = [0, 127], sizes = [8, 128], strides = [1, 1]} : vector<8x384xf32> to vector<8x128xf32>
    %118 = vector.extract_strided_slice %12 {offsets = [3, 0], sizes = [1, 128], strides = [1, 1]} : vector<9x128xf32> to vector<1x128xf32>
    %119 = vector.broadcast %118 : vector<1x128xf32> to vector<8x128xf32>
    %120 = arith.mulf %117, %119 : vector<8x128xf32>
    %121 = vector.extract_strided_slice %104 {offsets = [0, 128], sizes = [8, 128], strides = [1, 1]} : vector<8x384xf32> to vector<8x128xf32>
    %122 = vector.extract_strided_slice %12 {offsets = [4, 0], sizes = [1, 128], strides = [1, 1]} : vector<9x128xf32> to vector<1x128xf32>
    %123 = vector.broadcast %122 : vector<1x128xf32> to vector<8x128xf32>
    %124 = arith.mulf %121, %123 : vector<8x128xf32>
    %125 = vector.extract_strided_slice %104 {offsets = [0, 129], sizes = [8, 128], strides = [1, 1]} : vector<8x384xf32> to vector<8x128xf32>
    %126 = vector.extract_strided_slice %12 {offsets = [5, 0], sizes = [1, 128], strides = [1, 1]} : vector<9x128xf32> to vector<1x128xf32>
    %127 = vector.broadcast %126 : vector<1x128xf32> to vector<8x128xf32>
    %128 = arith.mulf %125, %127 : vector<8x128xf32>
    %129 = vector.extract_strided_slice %104 {offsets = [0, 131], sizes = [8, 128], strides = [1, 1]} : vector<8x384xf32> to vector<8x128xf32>
    %130 = vector.extract_strided_slice %12 {offsets = [6, 0], sizes = [1, 128], strides = [1, 1]} : vector<9x128xf32> to vector<1x128xf32>
    %131 = vector.broadcast %130 : vector<1x128xf32> to vector<8x128xf32>
    %132 = arith.mulf %129, %131 : vector<8x128xf32>
    %133 = vector.extract_strided_slice %104 {offsets = [0, 132], sizes = [8, 128], strides = [1, 1]} : vector<8x384xf32> to vector<8x128xf32>
    %134 = vector.extract_strided_slice %12 {offsets = [7, 0], sizes = [1, 128], strides = [1, 1]} : vector<9x128xf32> to vector<1x128xf32>
    %135 = vector.broadcast %134 : vector<1x128xf32> to vector<8x128xf32>
    %136 = arith.mulf %133, %135 : vector<8x128xf32>
    %137 = vector.extract_strided_slice %104 {offsets = [0, 133], sizes = [8, 128], strides = [1, 1]} : vector<8x384xf32> to vector<8x128xf32>
    %138 = vector.extract_strided_slice %12 {offsets = [8, 0], sizes = [1, 128], strides = [1, 1]} : vector<9x128xf32> to vector<1x128xf32>
    %139 = vector.broadcast %138 : vector<1x128xf32> to vector<8x128xf32>
    %140 = arith.mulf %137, %139 : vector<8x128xf32>
    %141 = tpu.concatenate %108, %112, %116, %120, %124, %128, %132, %136, %140 in 0 : vector<8x128xf32>, vector<8x128xf32>, vector<8x128xf32>, vector<8x128xf32>, vector<8x128xf32>, vector<8x128xf32>, vector<8x128xf32>, vector<8x128xf32>, vector<8x128xf32> -> vector<72x128xf32>
    %c24 = arith.constant 24 : index
    %c0_21 = arith.constant 0 : index
    %142 = vector.load %arg2[%c24, %c0_21] : memref<40x72xf32, #tpu.memory_space<vmem>>, vector<8x72xf32>
    %cst_22 = arith.constant dense<0.000000e+00> : vector<8x128xf32>
    %143 = tpu.matmul %142, %141, %cst_22 {dimension_numbers = #tpu.dot_dimension_numbers<[1], [0], [0], [1], [0, 0, 1, 1], [], []>} : vector<8x72xf32>, vector<72x128xf32>, vector<8x128xf32> -> vector<8x128xf32>
    %c0_23 = arith.constant 0 : index
    %c3 = arith.constant 3 : index
    %144 = vector.load %arg3[%c0_23, %c3] : memref<8x8xf32, #tpu.memory_space<vmem>>, vector<8x1xf32>
    %145 = vector.broadcast %144 : vector<8x1xf32> to vector<8x128xf32>
    %146 = arith.addf %143, %145 : vector<8x128xf32>
    %cst_24 = arith.constant 0.000000e+00 : f32
    %147 = vector.broadcast %cst_24 : f32 to vector<8x128xf32>
    %148 = arith.maximumf %146, %147 : vector<8x128xf32>
    %c32 = arith.constant 32 : index
    %c0_25 = arith.constant 0 : index
    %149 = vector.load %arg2[%c32, %c0_25] : memref<40x72xf32, #tpu.memory_space<vmem>>, vector<8x8xf32>
    %cst_26 = arith.constant dense<0.000000e+00> : vector<8x128xf32>
    %150 = tpu.matmul %149, %148, %cst_26 {dimension_numbers = #tpu.dot_dimension_numbers<[1], [0], [0], [1], [0, 0, 1, 1], [], []>} : vector<8x8xf32>, vector<8x128xf32>, vector<8x128xf32> -> vector<8x128xf32>
    %c0_27 = arith.constant 0 : index
    %c4 = arith.constant 4 : index
    %151 = vector.load %arg3[%c0_27, %c4] : memref<8x8xf32, #tpu.memory_space<vmem>>, vector<8x1xf32>
    %152 = vector.broadcast %151 : vector<8x1xf32> to vector<8x128xf32>
    %153 = arith.addf %150, %152 : vector<8x128xf32>
    %c0_28 = arith.constant 0 : index
    %c0_29 = arith.constant 0 : index
    %154 = vector.load %arg5[%c0_28, %c0_29] : memref<8x128xf32, #tpu.memory_space<vmem>>, vector<8x128xf32>
    tpu.vector_store %arg5[%c0_28, %c0_29], %153 {strides = array<i32>} : memref<8x128xf32, #tpu.memory_space<vmem>>, vector<8x128xf32>,
    return
  }
}

</mosaic_0001>

<llo_original>
// kernel: coeffs_forward.1
$region0: #{coeffs_forward.1}
  #allocation0 [shape = 'u32[]', space=smem, size = 0x4, offset = 0x4, fixed_abs, tag = 'smem constant byte address 0x4 - core index']
  #allocation1 [shape = 'u32[144,128]{1,0:T(1,128)}', space=vmem, size = 0x12000, scoped, tag = 'internal scratch']
  %s0 = inlined_call_operand.vmem [shape: f32[288,128], index: 0, kind: input, shape index: {}]
  %s1 = inlined_call_operand.vmem [shape: f32[72,288], index: 1, kind: input, shape index: {}]
  %s2 = inlined_call_operand.vmem [shape: f32[40,72], index: 2, kind: input, shape index: {}]
  %s3 = inlined_call_operand.vmem [shape: f32[8,8], index: 3, kind: input, shape index: {}]
  %s4 = inlined_call_operand.vmem [shape: f32[9,128], index: 4, kind: input, shape index: {}]
  %s5 = inlined_call_operand.vmem [shape: f32[8,128], index: 5, kind: output, shape index: {}]
  %s6 = sld [smem:[#allocation0]]
  $region30: #{coeffs_forward.1} parent=0
    _
  %s8 = ssub.s32 1, %s6
  %s9 = scalar_select 0, %s8, %s6
  // Predicated region
  $region2: #{coeffs_forward.1} parent=0 // pred_check
    _
  $region3: #{coeffs_forward.1} parent=0 // pred_check_branch
    %11 = sbr.rel (0) target = $region5
  $region4: #{coeffs_forward.1} parent=0 // pred_region
    _
  $region5: #{coeffs_forward.1} parent=0 // pred_fallthru
    _
  // Predicated region
  $region6: #{coeffs_forward.1} parent=0 // pred_check
    _
  $region7: #{coeffs_forward.1} parent=0 // pred_check_branch
    %13 = sbr.rel (0) target = $region9
  $region8: #{coeffs_forward.1} parent=0 // pred_region
    _
  $region9: #{coeffs_forward.1} parent=0 // pred_fallthru
    _
  // Predicated region
  $region10: #{coeffs_forward.1} parent=0 // pred_check
    _
  $region11: #{coeffs_forward.1} parent=0 // pred_check_branch
    %15 = sbr.rel (0) target = $region13
  $region12: #{coeffs_forward.1} parent=0 // pred_region
    _
  $region13: #{coeffs_forward.1} parent=0 // pred_fallthru
    _
  // Predicated region
  $region14: #{coeffs_forward.1} parent=0 // pred_check
    _
  $region15: #{coeffs_forward.1} parent=0 // pred_check_branch
    %17 = sbr.rel (0) target = $region17
  $region16: #{coeffs_forward.1} parent=0 // pred_region
    _
  $region17: #{coeffs_forward.1} parent=0 // pred_fallthru
    _
  // Predicated region
  $region18: #{coeffs_forward.1} parent=0 // pred_check
    _
  $region19: #{coeffs_forward.1} parent=0 // pred_check_branch
    %19 = sbr.rel (0) target = $region21
  $region20: #{coeffs_forward.1} parent=0 // pred_region
    _
  $region21: #{coeffs_forward.1} parent=0 // pred_fallthru
    _
  %v20 = vld [vmem:[%s1] sm:$0xff]
  %v21 = vld [vmem:[%s1 + $0x8] sm:$0xff]
  %v22 = vld [vmem:[%s1 + $0x10] sm:$0xff]
  %v23 = vld [vmem:[%s1 + $0x18] sm:$0xff]
  %v24 = vld [vmem:[%s1 + $0x20] sm:$0xff]
  %v25 = vld [vmem:[%s1 + $0x28] sm:$0xff]
  %v26 = vld [vmem:[%s1 + $0x30] sm:$0xff]
  %v27 = vld [vmem:[%s1 + $0x38] sm:$0xff]
  %v28 = vld [vmem:[%s1 + $0x40] sm:$0xff]
  %v29 = vld [vmem:[%s1 + $0x48] sm:$0xff]
  %v30 = vld [vmem:[%s1 + $0x50] sm:$0xff]
  %v31 = vld [vmem:[%s1 + $0x58] sm:$0xff]
  %v32 = vld [vmem:[%s1 + $0x60] sm:$0xff]
  %v33 = vld [vmem:[%s1 + $0x68] sm:$0xff]
  %v34 = vld [vmem:[%s1 + $0x70] sm:$0xff]
  %v35 = vld [vmem:[%s1 + $0x78] sm:$0xff]
  %v36 = vld [vmem:[%s1 + $0x80] sm:$0xff]
  %v37 = vld [vmem:[%s1 + $0x88] sm:$0xff]
  %v38 = vld [vmem:[%s1 + $0x90] sm:$0xff]
  %v39 = vld [vmem:[%s1 + $0x98] sm:$0xff]
  %v40 = vld [vmem:[%s1 + $0xa0] sm:$0xff]
  %v41 = vld [vmem:[%s1 + $0xa8] sm:$0xff]
  %v42 = vld [vmem:[%s1 + $0xb0] sm:$0xff]
  %v43 = vld [vmem:[%s1 + $0xb8] sm:$0xff]
  %v44 = vld [vmem:[%s1 + $0xc0] sm:$0xff]
  %v45 = vld [vmem:[%s1 + $0xc8] sm:$0xff]
  %v46 = vld [vmem:[%s1 + $0xd0] sm:$0xff]
  %v47 = vld [vmem:[%s0] sm:$0xff]
  %v48 = vld [vmem:[%s0 + $0x8] sm:$0xff]
  %v49 = vld [vmem:[%s0 + $0x10] sm:$0xff]
  %v50 = vld [vmem:[%s0 + $0x18] sm:$0xff]
  %v51 = vld [vmem:[%s0 + $0x20] sm:$0xff]
  %v52 = vld [vmem:[%s0 + $0x28] sm:$0xff]
  %v53 = vld [vmem:[%s0 + $0x30] sm:$0xff]
  %v54 = vld [vmem:[%s0 + $0x38] sm:$0xff]
  %v55 = vld [vmem:[%s0 + $0x40] sm:$0xff]
  %v56 = vld [vmem:[%s0 + $0x48] sm:$0xff]
  %v57 = vld [vmem:[%s0 + $0x50] sm:$0xff]
  %v58 = vld [vmem:[%s0 + $0x58] sm:$0xff]
  %v59 = vld [vmem:[%s0 + $0x60] sm:$0xff]
  %v60 = vld [vmem:[%s0 + $0x68] sm:$0xff]
  %v61 = vld [vmem:[%s0 + $0x70] sm:$0xff]
  %v62 = vld [vmem:[%s0 + $0x78] sm:$0xff]
  %v63 = vld [vmem:[%s0 + $0x80] sm:$0xff]
  %v64 = vld [vmem:[%s0 + $0x88] sm:$0xff]
  %v65 = vld [vmem:[%s0 + $0x90] sm:$0xff]
  %v66 = vld [vmem:[%s0 + $0x98] sm:$0xff]
  %v67 = vld [vmem:[%s0 + $0xa0] sm:$0xff]
  %v68 = vld [vmem:[%s0 + $0xa8] sm:$0xff]
  %v69 = vld [vmem:[%s0 + $0xb0] sm:$0xff]
  %v70 = vld [vmem:[%s0 + $0xb8] sm:$0xff]
  %v71 = vld [vmem:[%s0 + $0xc0] sm:$0xff]
  %v72 = vld [vmem:[%s0 + $0xc8] sm:$0xff]
  %v73 = vld [vmem:[%s0 + $0xd0] sm:$0xff]
  %v74 = vld [vmem:[%s0 + $0xd8] sm:$0xff]
  %v75 = vld [vmem:[%s0 + $0xe0] sm:$0xff]
  %v76 = vld [vmem:[%s0 + $0xe8] sm:$0xff]
  %v77 = vld [vmem:[%s0 + $0xf0] sm:$0xff]
  %v78 = vld [vmem:[%s0 + $0xf8] sm:$0xff]
  %v79 = vld [vmem:[%s0 + $0x100] sm:$0xff]
  %v80 = vld [vmem:[%s0 + $0x108] sm:$0xff]
  %v81 = vld [vmem:[%s0 + $0x110] sm:$0xff]
  %v82 = vld [vmem:[%s0 + $0x118] sm:$0xff]
  %vm83 = vcmask 261120
  %v85 = vsel %vm83, %v22, 0
  %v88 = vsel %vm83, %v25, 0
  %v91 = vsel %vm83, %v28, 0
  %v94 = vsel %vm83, %v31, 0
  %v97 = vsel %vm83, %v34, 0
  %v100 = vsel %vm83, %v37, 0
  %v103 = vsel %vm83, %v40, 0
  %v106 = vsel %vm83, %v43, 0
  %v109 = vsel %vm83, %v46, 0
  %111 = vmatprep.subr.mxu0 0.0
  %112 = vmatpush1.msra.mxu0 %v47
  %113 = vmatprep.subr.mxu0 0.0
  %114 = vmatpush1.msra.mxu0 %v48
  %115 = vmatprep.subr.mxu0 0.0
  %116 = vmatpush1.msra.mxu0 %v49
  %117 = vmatprep.subr.mxu0 0.0
  %118 = vmatpush1.msra.mxu0 %v50
  %119 = vmatprep.subr.mxu0 0.0
  %120 = vmatpush1.msra.mxu0 %v51
  %121 = vmatprep.subr.mxu0 0.0
  %122 = vmatpush1.msra.mxu0 %v52
  %123 = vmatprep.subr.mxu0 0.0
  %124 = vmatpush1.msra.mxu0 %v53
  %125 = vmatprep.subr.mxu0 0.0
  %126 = vmatpush1.msra.mxu0 %v54
  %127 = vmatprep.subr.mxu0 0.0
  %128 = vmatpush1.msra.mxu0 %v55
  %129 = vmatprep.subr.mxu0 0.0
  %130 = vmatpush1.msra.mxu0 %v56
  %131 = vmatprep.subr.mxu0 0.0
  %132 = vmatpush1.msra.mxu0 %v57
  %133 = vmatprep.subr.mxu0 0.0
  %134 = vmatpush1.msra.mxu0 %v58
  %135 = vmatprep.subr.mxu0 0.0
  %136 = vmatpush1.msra.mxu0 %v59
  %137 = vmatprep.subr.mxu0 0.0
  %138 = vmatpush1.msra.mxu0 %v60
  %139 = vmatprep.subr.mxu0 0.0
  %140 = vmatpush1.msra.mxu0 %v61
  %141 = vmatprep.subr.mxu0 0.0
  %142 = vmatpush1.msra.mxu0 %v62
  %143 = vmatprep.subr.mxu0 0.0
  %144 = vmatpush1.msra.mxu0 %v63
  %145 = vmatprep.subr.mxu0 0.0
  %146 = vmatpush1.msra.mxu0 %v64
  %147 = vmatprep.subr.mxu0 0.0
  %148 = vmatpush1.msra.mxu0 %v65
  %149 = vmatprep.subr.mxu0 0.0
  %150 = vmatpush1.msra.mxu0 %v66
  %151 = vmatprep.subr.mxu0 0.0
  %152 = vmatpush1.msra.mxu0 %v67
  %153 = vmatprep.subr.mxu0 0.0
  %154 = vmatpush1.msra.mxu0 %v68
  %155 = vmatprep.subr.mxu0 0.0
  %156 = vmatpush1.msra.mxu0 %v69
  %157 = vmatprep.subr.mxu0 0.0
  %158 = vmatpush1.msra.mxu0 %v70
  %159 = vmatprep.subr.mxu0 0.0
  %160 = vmatpush1.msra.mxu0 %v71
  %161 = vmatprep.subr.mxu0 0.0
  %162 = vmatpush1.msra.mxu0 %v72
  %163 = vmatprep.subr.mxu0 0.0
  %164 = vmatpush1.msra.mxu0 %v73
  %165 = vmatprep.subr.mxu0 0.0
  %166 = vmatpush1.msra.mxu0 %v74
  %167 = vmatprep.subr.mxu0 0.0
  %168 = vmatpush1.msra.mxu0 %v75
  %169 = vmatprep.subr.mxu0 0.0
  %170 = vmatpush1.msra.mxu0 %v76
  %171 = vmatprep.subr.mxu0 0.0
  %172 = vmatpush1.msra.mxu0 %v77
  %173 = vmatprep.subr.mxu0 0.0
  %174 = vmatpush1.msra.mxu0 %v78
  %175 = vmatprep.mubr.f32.mxu0 %v21
  %176 = vmatmul.mubr.f32.gmra.mrb[0].mxu0 %v20
  %v177 = vpop.f32.mrb[0].mxu0
  %v178 = vadd.f32 0.0, %v177
  %v179 = vpop.f32.mrb[0].mxu0
  %180 = vmatprep.mubr.f32.mxu0 %v24
  %181 = vmatmul.mubr.f32.gmra.mrb[0].mxu0 %v23
  %v182 = vpop.f32.mrb[0].mxu0
  %v183 = vadd.f32 0.0, %v182
  %v184 = vpop.f32.mrb[0].mxu0
  %185 = vmatprep.mubr.f32.mxu0 %v27
  %186 = vmatmul.mubr.f32.gmra.mrb[0].mxu0 %v26
  %v187 = vpop.f32.mrb[0].mxu0
  %v188 = vadd.f32 0.0, %v187
  %v189 = vpop.f32.mrb[0].mxu0
  %190 = vmatprep.mubr.f32.mxu0 %v30
  %191 = vmatmul.mubr.f32.gmra.mrb[0].mxu0 %v29
  %v192 = vpop.f32.mrb[0].mxu0
  %v193 = vadd.f32 0.0, %v192
  %v194 = vpop.f32.mrb[0].mxu0
  %195 = vmatprep.mubr.f32.mxu0 %v33
  %196 = vmatmul.mubr.f32.gmra.mrb[0].mxu0 %v32
  %v197 = vpop.f32.mrb[0].mxu0
  %v198 = vadd.f32 0.0, %v197
  %v199 = vpop.f32.mrb[0].mxu0
  %200 = vmatprep.mubr.f32.mxu0 %v36
  %201 = vmatmul.mubr.f32.gmra.mrb[0].mxu0 %v35
  %v202 = vpop.f32.mrb[0].mxu0
  %v203 = vadd.f32 0.0, %v202
  %v204 = vpop.f32.mrb[0].mxu0
  %205 = vmatprep.mubr.f32.mxu0 %v39
  %206 = vmatmul.mubr.f32.gmra.mrb[0].mxu0 %v38
  %v207 = vpop.f32.mrb[0].mxu0
  %v208 = vadd.f32 0.0, %v207
  %v209 = vpop.f32.mrb[0].mxu0
  %210 = vmatprep.mubr.f32.mxu0 %v42
  %211 = vmatmul.mubr.f32.gmra.mrb[0].mxu0 %v41
  %v212 = vpop.f32.mrb[0].mxu0
  %v213 = vadd.f32 0.0, %v212
  %v214 = vpop.f32.mrb[0].mxu0
  %215 = vmatprep.mubr.f32.mxu0 %v45
  %216 = vmatmul.mubr.f32.gmra.mrb[0].mxu0 %v44
  %v217 = vpop.f32.mrb[0].mxu0
  %v218 = vadd.f32 0.0, %v217
  %v219 = vpop.f32.mrb[0].mxu0
  %220 = vdwg.mxu0
  %221 = vmatprep.subr.mxu0 0.0
  %222 = vmatpush1.msra.mxu0 %v79
  %223 = vmatprep.subr.mxu0 0.0
  %224 = vmatpush1.msra.mxu0 %v80
  %225 = vmatprep.subr.mxu0 0.0
  %226 = vmatpush1.msra.mxu0 %v81
  %227 = vmatprep.subr.mxu0 0.0
  %228 = vmatpush1.msra.mxu0 %v82
  %229 = vmatprep.subr.mxu0 0.0
  %230 = vmatpush1.msra.mxu0 0.0
  %231 = vmatprep.subr.mxu0 0.0
  %232 = vmatpush1.msra.mxu0 0.0
  %233 = vmatprep.subr.mxu0 0.0
  %234 = vmatpush1.msra.mxu0 0.0
  %235 = vmatprep.subr.mxu0 0.0
  %236 = vmatpush1.msra.mxu0 0.0
  %237 = vmatprep.subr.mxu0 0.0
  %238 = vmatpush1.msra.mxu0 0.0
  %239 = vmatprep.subr.mxu0 0.0
  %240 = vmatpush1.msra.mxu0 0.0
  %241 = vmatprep.subr.mxu0 0.0
  %242 = vmatpush1.msra.mxu0 0.0
  %243 = vmatprep.subr.mxu0 0.0
  %244 = vmatpush1.msra.mxu0 0.0
  %245 = vmatprep.subr.mxu0 0.0
  %246 = vmatpush1.msra.mxu0 0.0
  %247 = vmatprep.subr.mxu0 0.0
  %248 = vmatpush1.msra.mxu0 0.0
  %249 = vmatprep.subr.mxu0 0.0
  %250 = vmatpush1.msra.mxu0 0.0
  %251 = vmatprep.subr.mxu0 0.0
  %252 = vmatpush1.msra.mxu0 0.0
  %253 = vmatprep.subr.mxu0 0.0
  %254 = vmatpush1.msra.mxu0 0.0
  %255 = vmatprep.subr.mxu0 0.0
  %256 = vmatpush1.msra.mxu0 0.0
  %257 = vmatprep.subr.mxu0 0.0
  %258 = vmatpush1.msra.mxu0 0.0
  %259 = vmatprep.subr.mxu0 0.0
  %260 = vmatpush1.msra.mxu0 0.0
  %261 = vmatprep.subr.mxu0 0.0
  %262 = vmatpush1.msra.mxu0 0.0
  %263 = vmatprep.subr.mxu0 0.0
  %264 = vmatpush1.msra.mxu0 0.0
  %265 = vmatprep.subr.mxu0 0.0
  %266 = vmatpush1.msra.mxu0 0.0
  %267 = vmatprep.subr.mxu0 0.0
  %268 = vmatpush1.msra.mxu0 0.0
  %269 = vmatprep.subr.mxu0 0.0
  %270 = vmatpush1.msra.mxu0 0.0
  %271 = vmatprep.subr.mxu0 0.0
  %272 = vmatpush1.msra.mxu0 0.0
  %273 = vmatprep.subr.mxu0 0.0
  %274 = vmatpush1.msra.mxu0 0.0
  %275 = vmatprep.subr.mxu0 0.0
  %276 = vmatpush1.msra.mxu0 0.0
  %277 = vmatprep.subr.mxu0 0.0
  %278 = vmatpush1.msra.mxu0 0.0
  %279 = vmatprep.subr.mxu0 0.0
  %280 = vmatpush1.msra.mxu0 0.0
  %281 = vmatprep.subr.mxu0 0.0
  %282 = vmatpush1.msra.mxu0 0.0
  %283 = vmatprep.subr.mxu0 0.0
  %284 = vmatpush1.msra.mxu0 0.0
  %285 = vmatprep.mubr.f32.mxu0 0.0
  %286 = vmatmul.mubr.f32.gmra.mrb[0].mxu0 %v85
  %v287 = vpop.f32.mrb[0].mxu0
  %v288 = vadd.f32 %v178, %v287
  %v289 = vpop.f32.mrb[0].mxu0
  %290 = vmatprep.mubr.f32.mxu0 0.0
  %291 = vmatmul.mubr.f32.gmra.mrb[0].mxu0 %v88
  %v292 = vpop.f32.mrb[0].mxu0
  %v293 = vadd.f32 %v183, %v292
  %v294 = vpop.f32.mrb[0].mxu0
  %295 = vmatprep.mubr.f32.mxu0 0.0
  %296 = vmatmul.mubr.f32.gmra.mrb[0].mxu0 %v91
  %v297 = vpop.f32.mrb[0].mxu0
  %v298 = vadd.f32 %v188, %v297
  %v299 = vpop.f32.mrb[0].mxu0
  %300 = vmatprep.mubr.f32.mxu0 0.0
  %301 = vmatmul.mubr.f32.gmra.mrb[0].mxu0 %v94
  %v302 = vpop.f32.mrb[0].mxu0
  %v303 = vadd.f32 %v193, %v302
  %v304 = vpop.f32.mrb[0].mxu0
  %305 = vmatprep.mubr.f32.mxu0 0.0
  %306 = vmatmul.mubr.f32.gmra.mrb[0].mxu0 %v97
  %v307 = vpop.f32.mrb[0].mxu0
  %v308 = vadd.f32 %v198, %v307
  %v309 = vpop.f32.mrb[0].mxu0
  %310 = vmatprep.mubr.f32.mxu0 0.0
  %311 = vmatmul.mubr.f32.gmra.mrb[0].mxu0 %v100
  %v312 = vpop.f32.mrb[0].mxu0
  %v313 = vadd.f32 %v203, %v312
  %v314 = vpop.f32.mrb[0].mxu0
  %315 = vmatprep.mubr.f32.mxu0 0.0
  %316 = vmatmul.mubr.f32.gmra.mrb[0].mxu0 %v103
  %v317 = vpop.f32.mrb[0].mxu0
  %v318 = vadd.f32 %v208, %v317
  %v319 = vpop.f32.mrb[0].mxu0
  %320 = vmatprep.mubr.f32.mxu0 0.0
  %321 = vmatmul.mubr.f32.gmra.mrb[0].mxu0 %v106
  %v322 = vpop.f32.mrb[0].mxu0
  %v323 = vadd.f32 %v213, %v322
  %v324 = vpop.f32.mrb[0].mxu0
  %325 = vmatprep.mubr.f32.mxu0 0.0
  %326 = vmatmul.mubr.f32.gmra.mrb[0].mxu0 %v109
  %v327 = vpop.f32.mrb[0].mxu0
  %v328 = vadd.f32 %v218, %v327
  %v329 = vpop.f32.mrb[0].mxu0
  %330 = vdwg.mxu0
  %v331 = vmax.f32 %v288, 0.0
  %v332 = vmax.f32 %v293, 0.0
  %v333 = vmax.f32 %v298, 0.0
  %v334 = vmax.f32 %v303, 0.0
  %v335 = vmax.f32 %v308, 0.0
  %v336 = vmax.f32 %v313, 0.0
  %v337 = vmax.f32 %v318, 0.0
  %v338 = vmax.f32 %v323, 0.0
  %v339 = vmax.f32 %v328, 0.0
  %v340 = vld [vmem:[%s2] sm:$0xff]
  %v341 = vld [vmem:[%s3] sm:$0xff]
  %343 = vset.pattern.permute.xlu0 0
  %344 = vperm.xlu0 %343, %v341
  %v345 = vpop.permute.xlu0 %344
  %vm347 = vcmask 588800
  %v349 = vsel %vm347, %v340, 0
  %351 = vmatprep.subr.mxu0 0.0
  %352 = vmatpush1.msra.mxu0 %v331
  %353 = vmatprep.subr.mxu0 0.0
  %354 = vmatpush1.msra.mxu0 %v332
  %355 = vmatprep.subr.mxu0 0.0
  %356 = vmatpush1.msra.mxu0 %v333
  %357 = vmatprep.subr.mxu0 0.0
  %358 = vmatpush1.msra.mxu0 %v334
  %359 = vmatprep.subr.mxu0 0.0
  %360 = vmatpush1.msra.mxu0 %v335
  %361 = vmatprep.subr.mxu0 0.0
  %362 = vmatpush1.msra.mxu0 %v336
  %363 = vmatprep.subr.mxu0 0.0
  %364 = vmatpush1.msra.mxu0 %v337
  %365 = vmatprep.subr.mxu0 0.0
  %366 = vmatpush1.msra.mxu0 %v338
  %367 = vmatprep.subr.mxu0 0.0
  %368 = vmatpush1.msra.mxu0 %v339
  %369 = vmatprep.subr.mxu0 0.0
  %370 = vmatpush1.msra.mxu0 0.0
  %371 = vmatprep.subr.mxu0 0.0
  %372 = vmatpush1.msra.mxu0 0.0
  %373 = vmatprep.subr.mxu0 0.0
  %374 = vmatpush1.msra.mxu0 0.0
  %375 = vmatprep.subr.mxu0 0.0
  %376 = vmatpush1.msra.mxu0 0.0
  %377 = vmatprep.subr.mxu0 0.0
  %378 = vmatpush1.msra.mxu0 0.0
  %379 = vmatprep.subr.mxu0 0.0
  %380 = vmatpush1.msra.mxu0 0.0
  %381 = vmatprep.subr.mxu0 0.0
  %382 = vmatpush1.msra.mxu0 0.0
  %383 = vmatprep.subr.mxu0 0.0
  %384 = vmatpush1.msra.mxu0 0.0
  %385 = vmatprep.subr.mxu0 0.0
  %386 = vmatpush1.msra.mxu0 0.0
  %387 = vmatprep.subr.mxu0 0.0
  %388 = vmatpush1.msra.mxu0 0.0
  %389 = vmatprep.subr.mxu0 0.0
  %390 = vmatpush1.msra.mxu0 0.0
  %391 = vmatprep.subr.mxu0 0.0
  %392 = vmatpush1.msra.mxu0 0.0
  %393 = vmatprep.subr.mxu0 0.0
  %394 = vmatpush1.msra.mxu0 0.0
  %395 = vmatprep.subr.mxu0 0.0
  %396 = vmatpush1.msra.mxu0 0.0
  %397 = vmatprep.subr.mxu0 0.0
  %398 = vmatpush1.msra.mxu0 0.0
  %399 = vmatprep.subr.mxu0 0.0
  %400 = vmatpush1.msra.mxu0 0.0
  %401 = vmatprep.subr.mxu0 0.0
  %402 = vmatpush1.msra.mxu0 0.0
  %403 = vmatprep.subr.mxu0 0.0
  %404 = vmatpush1.msra.mxu0 0.0
  %405 = vmatprep.subr.mxu0 0.0
  %406 = vmatpush1.msra.mxu0 0.0
  %407 = vmatprep.subr.mxu0 0.0
  %408 = vmatpush1.msra.mxu0 0.0
  %409 = vmatprep.subr.mxu0 0.0
  %410 = vmatpush1.msra.mxu0 0.0
  %411 = vmatprep.subr.mxu0 0.0
  %412 = vmatpush1.msra.mxu0 0.0
  %413 = vmatprep.subr.mxu0 0.0
  %414 = vmatpush1.msra.mxu0 0.0
  %415 = vmatprep.mubr.f32.mxu0 0.0
  %416 = vmatmul.mubr.f32.gmra.mrb[0].mxu0 %v349
  %v417 = vpop.f32.mrb[0].mxu0
  %v418 = vadd.f32 %v345, %v417
  %v419 = vpop.f32.mrb[0].mxu0
  %420 = vdwg.mxu0
  %v421 = vmax.f32 %v418, 0.0
  %v422 = vld [vmem:[%s4] sm:$0xff]
  %v423 = vld [vmem:[%s4 + $0x8] sm:$0x1]
  %v424 = vlaneseq
  %v425 = vshrl.u32 %v424, 7
  %v426 = vsub.s32 0, %v425
  %v427 = vrot.slane %v422, %v426
  %429 = vrot.lane.b32.xlu0 %v427, 123
  %v430 = vpop.permute.xlu0 %429
  %v432 = vmul.f32 %v430, 0.0
  %v433 = vmul.f32 %v421, %v430
  %v434 = vlaneseq
  %v435 = vshrl.u32 %v434, 7
  %v436 = vsub.s32 1, %v435
  %v437 = vrot.slane %v422, %v436
  %439 = vrot.lane.b32.xlu0 %v437, 124
  %v440 = vpop.permute.xlu0 %439
  %v442 = vmul.f32 %v440, 0.0
  %v443 = vmul.f32 %v421, %v440
  %v444 = vlaneseq
  %v445 = vshrl.u32 %v444, 7
  %v446 = vsub.s32 2, %v445
  %v447 = vrot.slane %v422, %v446
  %449 = vrot.lane.b32.xlu0 %v447, 125
  %v450 = vpop.permute.xlu0 %449
  %v452 = vmul.f32 %v450, 0.0
  %v453 = vmul.f32 %v421, %v450
  %v454 = vlaneseq
  %v455 = vshrl.u32 %v454, 7
  %v456 = vsub.s32 3, %v455
  %v457 = vrot.slane %v422, %v456
  %459 = vrot.lane.b32.xlu0 %v457, 127
  %v460 = vpop.permute.xlu0 %459
  %v462 = vmul.f32 %v460, 0.0
  %v463 = vmul.f32 %v421, %v460
  %v464 = vlaneseq
  %v465 = vshrl.u32 %v464, 7
  %v466 = vsub.s32 4, %v465
  %v467 = vrot.slane %v422, %v466
  %v468 = vmul.f32 %v421, %v467
  %v469 = vlaneseq
  %v470 = vshrl.u32 %v469, 7
  %v471 = vsub.s32 5, %v470
  %v472 = vrot.slane %v422, %v471
  %474 = vrot.lane.b32.xlu0 %v472, 1
  %v475 = vpop.permute.xlu0 %474
  %v477 = vmul.f32 %v421, %v475
  %v478 = vmul.f32 %v475, 0.0
  %v479 = vlaneseq
  %v480 = vshrl.u32 %v479, 7
  %v481 = vsub.s32 6, %v480
  %v482 = vrot.slane %v422, %v481
  %484 = vrot.lane.b32.xlu0 %v482, 3
  %v485 = vpop.permute.xlu0 %484
  %v487 = vmul.f32 %v421, %v485
  %v488 = vmul.f32 %v485, 0.0
  %v489 = vlaneseq
  %v490 = vshrl.u32 %v489, 7
  %v491 = vsub.s32 7, %v490
  %v492 = vrot.slane %v422, %v491
  %494 = vrot.lane.b32.xlu0 %v492, 4
  %v495 = vpop.permute.xlu0 %494
  %v497 = vmul.f32 %v421, %v495
  %v498 = vmul.f32 %v495, 0.0
  %v499 = vlaneseq
  %v500 = vshrl.u32 %v499, 7
  %v501 = vsub.s32 0, %v500
  %v502 = vrot.slane %v423, %v501
  %504 = vrot.lane.b32.xlu0 %v502, 5
  %v505 = vpop.permute.xlu0 %504
  %v507 = vmul.f32 %v421, %v505
  %v508 = vmul.f32 %v505, 0.0
  %511 = vrot.lane.b32.xlu0 %v442, 127
  %v512 = vpop.permute.xlu0 %511
  %513 = vrot.lane.b32.xlu0 %v443, 127
  %v514 = vpop.permute.xlu0 %513
  %vm515 = vcmask 1039360
  %v516 = vsel %vm515, %v512, %v514
  %519 = vrot.lane.b32.xlu0 %v452, 126
  %v520 = vpop.permute.xlu0 %519
  %521 = vrot.lane.b32.xlu0 %v453, 126
  %v522 = vpop.permute.xlu0 %521
  %vm523 = vcmask 1031168
  %v524 = vsel %vm523, %v520, %v522
  %527 = vrot.lane.b32.xlu0 %v462, 124
  %v528 = vpop.permute.xlu0 %527
  %529 = vrot.lane.b32.xlu0 %v463, 124
  %v530 = vpop.permute.xlu0 %529
  %vm531 = vcmask 1014784
  %v532 = vsel %vm531, %v528, %v530
  %534 = vrot.lane.b32.xlu0 %v468, 123
  %v535 = vpop.permute.xlu0 %534
  %538 = vrot.lane.b32.xlu0 %v477, 122
  %v539 = vpop.permute.xlu0 %538
  %540 = vrot.lane.b32.xlu0 %v478, 122
  %v541 = vpop.permute.xlu0 %540
  %vm542 = vcmask 998400
  %v543 = vsel %vm542, %v539, %v541
  %546 = vrot.lane.b32.xlu0 %v487, 120
  %v547 = vpop.permute.xlu0 %546
  %548 = vrot.lane.b32.xlu0 %v488, 120
  %v549 = vpop.permute.xlu0 %548
  %vm550 = vcmask 982016
  %v551 = vsel %vm550, %v547, %v549
  %554 = vrot.lane.b32.xlu0 %v497, 119
  %v555 = vpop.permute.xlu0 %554
  %556 = vrot.lane.b32.xlu0 %v498, 119
  %v557 = vpop.permute.xlu0 %556
  %vm558 = vcmask 973824
  %v559 = vsel %vm558, %v555, %v557
  %562 = vrot.lane.b32.xlu0 %v507, 118
  %v563 = vpop.permute.xlu0 %562
  %564 = vrot.lane.b32.xlu0 %v508, 118
  %v565 = vpop.permute.xlu0 %564
  %vm566 = vcmask 965632
  %v567 = vsel %vm566, %v563, %v565
  %v568 = vld [vmem:[%s2 + $0x8] sm:$0xff]
  %569 = vset.pattern.permute.xlu0 1
  %570 = vperm.xlu0 %569, %v341
  %v571 = vpop.permute.xlu0 %570
  %575 = vrot.lane.b32.xlu0 %v432, 5
  %v576 = vpop.permute.xlu0 %575
  %577 = vrot.lane.b32.xlu0 %v433, 5
  %v578 = vpop.permute.xlu0 %577
  %579 = vrot.lane.b32.xlu0 %v516, 5
  %v580 = vpop.permute.xlu0 %579
  %581 = vrot.lane.b32.xlu0 %v514, 5
  %v582 = vpop.permute.xlu0 %581
  %583 = vrot.lane.b32.xlu0 %v524, 5
  %v584 = vpop.permute.xlu0 %583
  %585 = vrot.lane.b32.xlu0 %v522, 5
  %v586 = vpop.permute.xlu0 %585
  %587 = vrot.lane.b32.xlu0 %v532, 5
  %v588 = vpop.permute.xlu0 %587
  %589 = vrot.lane.b32.xlu0 %v530, 5
  %v590 = vpop.permute.xlu0 %589
  %591 = vrot.lane.b32.xlu0 %v535, 5
  %v592 = vpop.permute.xlu0 %591
  %593 = vrot.lane.b32.xlu0 %v539, 5
  %v594 = vpop.permute.xlu0 %593
  %595 = vrot.lane.b32.xlu0 %v543, 5
  %v596 = vpop.permute.xlu0 %595
  %597 = vrot.lane.b32.xlu0 %v547, 5
  %v598 = vpop.permute.xlu0 %597
  %599 = vrot.lane.b32.xlu0 %v551, 5
  %v600 = vpop.permute.xlu0 %599
  %601 = vrot.lane.b32.xlu0 %v555, 5
  %v602 = vpop.permute.xlu0 %601
  %603 = vrot.lane.b32.xlu0 %v559, 5
  %v604 = vpop.permute.xlu0 %603
  %605 = vrot.lane.b32.xlu0 %v563, 5
  %v606 = vpop.permute.xlu0 %605
  %607 = vrot.lane.b32.xlu0 %v567, 5
  %v608 = vpop.permute.xlu0 %607
  %vm609 = vcmask 39936
  %v610 = vsel %vm609, %v576, %v578
  %v611 = vsel %vm609, %v580, %v582
  %v612 = vsel %vm609, %v584, %v586
  %v613 = vsel %vm609, %v588, %v590
  %v614 = vsel %vm609, %v594, %v596
  %v615 = vsel %vm609, %v598, %v600
  %v616 = vsel %vm609, %v602, %v604
  %v617 = vsel %vm609, %v606, %v608
  %v628 = vsel %vm347, %v568, 0
  %630 = vmatprep.subr.mxu0 0.0
  %631 = vmatpush1.msra.mxu0 %v610
  %632 = vmatprep.subr.mxu0 0.0
  %633 = vmatpush1.msra.mxu0 %v611
  %634 = vmatprep.subr.mxu0 0.0
  %635 = vmatpush1.msra.mxu0 %v612
  %636 = vmatprep.subr.mxu0 0.0
  %637 = vmatpush1.msra.mxu0 %v613
  %638 = vmatprep.subr.mxu0 0.0
  %639 = vmatpush1.msra.mxu0 %v592
  %640 = vmatprep.subr.mxu0 0.0
  %641 = vmatpush1.msra.mxu0 %v614
  %642 = vmatprep.subr.mxu0 0.0
  %643 = vmatpush1.msra.mxu0 %v615
  %644 = vmatprep.subr.mxu0 0.0
  %645 = vmatpush1.msra.mxu0 %v616
  %646 = vmatprep.subr.mxu0 0.0
  %647 = vmatpush1.msra.mxu0 %v617
  %648 = vmatprep.subr.mxu0 0.0
  %649 = vmatpush1.msra.mxu0 0.0
  %650 = vmatprep.subr.mxu0 0.0
  %651 = vmatpush1.msra.mxu0 0.0
  %652 = vmatprep.subr.mxu0 0.0
  %653 = vmatpush1.msra.mxu0 0.0
  %654 = vmatprep.subr.mxu0 0.0
  %655 = vmatpush1.msra.mxu0 0.0
  %656 = vmatprep.subr.mxu0 0.0
  %657 = vmatpush1.msra.mxu0 0.0
  %658 = vmatprep.subr.mxu0 0.0
  %659 = vmatpush1.msra.mxu0 0.0
  %660 = vmatprep.subr.mxu0 0.0
  %661 = vmatpush1.msra.mxu0 0.0
  %662 = vmatprep.subr.mxu0 0.0
  %663 = vmatpush1.msra.mxu0 0.0
  %664 = vmatprep.subr.mxu0 0.0
  %665 = vmatpush1.msra.mxu0 0.0
  %666 = vmatprep.subr.mxu0 0.0
  %667 = vmatpush1.msra.mxu0 0.0
  %668 = vmatprep.subr.mxu0 0.0
  %669 = vmatpush1.msra.mxu0 0.0
  %670 = vmatprep.subr.mxu0 0.0
  %671 = vmatpush1.msra.mxu0 0.0
  %672 = vmatprep.subr.mxu0 0.0
  %673 = vmatpush1.msra.mxu0 0.0
  %674 = vmatprep.subr.mxu0 0.0
  %675 = vmatpush1.msra.mxu0 0.0
  %676 = vmatprep.subr.mxu0 0.0
  %677 = vmatpush1.msra.mxu0 0.0
  %678 = vmatprep.subr.mxu0 0.0
  %679 = vmatpush1.msra.mxu0 0.0
  %680 = vmatprep.subr.mxu0 0.0
  %681 = vmatpush1.msra.mxu0 0.0
  %682 = vmatprep.subr.mxu0 0.0
  %683 = vmatpush1.msra.mxu0 0.0
  %684 = vmatprep.subr.mxu0 0.0
  %685 = vmatpush1.msra.mxu0 0.0
  %686 = vmatprep.subr.mxu0 0.0
  %687 = vmatpush1.msra.mxu0 0.0
  %688 = vmatprep.subr.mxu0 0.0
  %689 = vmatpush1.msra.mxu0 0.0
  %690 = vmatprep.subr.mxu0 0.0
  %691 = vmatpush1.msra.mxu0 0.0
  %692 = vmatprep.subr.mxu0 0.0
  %693 = vmatpush1.msra.mxu0 0.0
  %694 = vmatprep.mubr.f32.mxu0 0.0
  %695 = vmatmul.mubr.f32.gmra.mrb[0].mxu0 %v628
  %v696 = vpop.f32.mrb[0].mxu0
  %v697 = vadd.f32 %v571, %v696
  %v698 = vpop.f32.mrb[0].mxu0
  %699 = vdwg.mxu0
  %v700 = vmax.f32 %v697, 0.0
  %v701 = vmul.f32 %v700, %v430
  %v702 = vmul.f32 %v700, %v440
  %v703 = vmul.f32 %v700, %v450
  %v704 = vmul.f32 %v700, %v460
  %v705 = vmul.f32 %v700, %v467
  %v706 = vmul.f32 %v700, %v475
  %v707 = vmul.f32 %v700, %v485
  %v708 = vmul.f32 %v700, %v495
  %v709 = vmul.f32 %v700, %v505
  %711 = vrot.lane.b32.xlu0 %v702, 127
  %v712 = vpop.permute.xlu0 %711
  %v713 = vsel %vm515, %v512, %v712
  %715 = vrot.lane.b32.xlu0 %v703, 126
  %v716 = vpop.permute.xlu0 %715
  %v717 = vsel %vm523, %v520, %v716
  %719 = vrot.lane.b32.xlu0 %v704, 124
  %v720 = vpop.permute.xlu0 %719
  %v721 = vsel %vm531, %v528, %v720
  %723 = vrot.lane.b32.xlu0 %v705, 123
  %v724 = vpop.permute.xlu0 %723
  %726 = vrot.lane.b32.xlu0 %v706, 122
  %v727 = vpop.permute.xlu0 %726
  %v728 = vsel %vm542, %v727, %v541
  %730 = vrot.lane.b32.xlu0 %v707, 120
  %v731 = vpop.permute.xlu0 %730
  %v732 = vsel %vm550, %v731, %v549
  %734 = vrot.lane.b32.xlu0 %v708, 119
  %v735 = vpop.permute.xlu0 %734
  %v736 = vsel %vm558, %v735, %v557
  %738 = vrot.lane.b32.xlu0 %v709, 118
  %v739 = vpop.permute.xlu0 %738
  %v740 = vsel %vm566, %v739, %v565
  %v741 = vld [vmem:[%s2 + $0x10] sm:$0xff]
  %742 = vset.pattern.permute.xlu0 2
  %743 = vperm.xlu0 %742, %v341
  %v744 = vpop.permute.xlu0 %743
  %747 = vrot.lane.b32.xlu0 %v701, 5
  %v748 = vpop.permute.xlu0 %747
  %749 = vrot.lane.b32.xlu0 %v713, 5
  %v750 = vpop.permute.xlu0 %749
  %751 = vrot.lane.b32.xlu0 %v712, 5
  %v752 = vpop.permute.xlu0 %751
  %753 = vrot.lane.b32.xlu0 %v717, 5
  %v754 = vpop.permute.xlu0 %753
  %755 = vrot.lane.b32.xlu0 %v716, 5
  %v756 = vpop.permute.xlu0 %755
  %757 = vrot.lane.b32.xlu0 %v721, 5
  %v758 = vpop.permute.xlu0 %757
  %759 = vrot.lane.b32.xlu0 %v720, 5
  %v760 = vpop.permute.xlu0 %759
  %761 = vrot.lane.b32.xlu0 %v724, 5
  %v762 = vpop.permute.xlu0 %761
  %763 = vrot.lane.b32.xlu0 %v727, 5
  %v764 = vpop.permute.xlu0 %763
  %765 = vrot.lane.b32.xlu0 %v728, 5
  %v766 = vpop.permute.xlu0 %765
  %767 = vrot.lane.b32.xlu0 %v731, 5
  %v768 = vpop.permute.xlu0 %767
  %769 = vrot.lane.b32.xlu0 %v732, 5
  %v770 = vpop.permute.xlu0 %769
  %771 = vrot.lane.b32.xlu0 %v735, 5
  %v772 = vpop.permute.xlu0 %771
  %773 = vrot.lane.b32.xlu0 %v736, 5
  %v774 = vpop.permute.xlu0 %773
  %775 = vrot.lane.b32.xlu0 %v739, 5
  %v776 = vpop.permute.xlu0 %775
  %777 = vrot.lane.b32.xlu0 %v740, 5
  %v778 = vpop.permute.xlu0 %777
  %v779 = vsel %vm609, %v576, %v748
  %v780 = vsel %vm609, %v750, %v752
  %v781 = vsel %vm609, %v754, %v756
  %v782 = vsel %vm609, %v758, %v760
  %v783 = vsel %vm609, %v764, %v766
  %v784 = vsel %vm609, %v768, %v770
  %v785 = vsel %vm609, %v772, %v774
  %v786 = vsel %vm609, %v776, %v778
  %v797 = vsel %vm347, %v741, 0
  %799 = vmatprep.subr.mxu0 0.0
  %800 = vmatpush1.msra.mxu0 %v779
  %801 = vmatprep.subr.mxu0 0.0
  %802 = vmatpush1.msra.mxu0 %v780
  %803 = vmatprep.subr.mxu0 0.0
  %804 = vmatpush1.msra.mxu0 %v781
  %805 = vmatprep.subr.mxu0 0.0
  %806 = vmatpush1.msra.mxu0 %v782
  %807 = vmatprep.subr.mxu0 0.0
  %808 = vmatpush1.msra.mxu0 %v762
  %809 = vmatprep.subr.mxu0 0.0
  %810 = vmatpush1.msra.mxu0 %v783
  %811 = vmatprep.subr.mxu0 0.0
  %812 = vmatpush1.msra.mxu0 %v784
  %813 = vmatprep.subr.mxu0 0.0
  %814 = vmatpush1.msra.mxu0 %v785
  %815 = vmatprep.subr.mxu0 0.0
  %816 = vmatpush1.msra.mxu0 %v786
  %817 = vmatprep.subr.mxu0 0.0
  %818 = vmatpush1.msra.mxu0 0.0
  %819 = vmatprep.subr.mxu0 0.0
  %820 = vmatpush1.msra.mxu0 0.0
  %821 = vmatprep.subr.mxu0 0.0
  %822 = vmatpush1.msra.mxu0 0.0
  %823 = vmatprep.subr.mxu0 0.0
  %824 = vmatpush1.msra.mxu0 0.0
  %825 = vmatprep.subr.mxu0 0.0
  %826 = vmatpush1.msra.mxu0 0.0
  %827 = vmatprep.subr.mxu0 0.0
  %828 = vmatpush1.msra.mxu0 0.0
  %829 = vmatprep.subr.mxu0 0.0
  %830 = vmatpush1.msra.mxu0 0.0
  %831 = vmatprep.subr.mxu0 0.0
  %832 = vmatpush1.msra.mxu0 0.0
  %833 = vmatprep.subr.mxu0 0.0
  %834 = vmatpush1.msra.mxu0 0.0
  %835 = vmatprep.subr.mxu0 0.0
  %836 = vmatpush1.msra.mxu0 0.0
  %837 = vmatprep.subr.mxu0 0.0
  %838 = vmatpush1.msra.mxu0 0.0
  %839 = vmatprep.subr.mxu0 0.0
  %840 = vmatpush1.msra.mxu0 0.0
  %841 = vmatprep.subr.mxu0 0.0
  %842 = vmatpush1.msra.mxu0 0.0
  %843 = vmatprep.subr.mxu0 0.0
  %844 = vmatpush1.msra.mxu0 0.0
  %845 = vmatprep.subr.mxu0 0.0
  %846 = vmatpush1.msra.mxu0 0.0
  %847 = vmatprep.subr.mxu0 0.0
  %848 = vmatpush1.msra.mxu0 0.0
  %849 = vmatprep.subr.mxu0 0.0
  %850 = vmatpush1.msra.mxu0 0.0
  %851 = vmatprep.subr.mxu0 0.0
  %852 = vmatpush1.msra.mxu0 0.0
  %853 = vmatprep.subr.mxu0 0.0
  %854 = vmatpush1.msra.mxu0 0.0
  %855 = vmatprep.subr.mxu0 0.0
  %856 = vmatpush1.msra.mxu0 0.0
  %857 = vmatprep.subr.mxu0 0.0
  %858 = vmatpush1.msra.mxu0 0.0
  %859 = vmatprep.subr.mxu0 0.0
  %860 = vmatpush1.msra.mxu0 0.0
  %861 = vmatprep.subr.mxu0 0.0
  %862 = vmatpush1.msra.mxu0 0.0
  %863 = vmatprep.mubr.f32.mxu0 0.0
  %864 = vmatmul.mubr.f32.gmra.mrb[0].mxu0 %v797
  %v865 = vpop.f32.mrb[0].mxu0
  %v866 = vadd.f32 %v744, %v865
  %v867 = vpop.f32.mrb[0].mxu0
  %868 = vdwg.mxu0
  %v869 = vmax.f32 %v866, 0.0
  %v870 = vmul.f32 %v869, %v430
  %v871 = vmul.f32 %v869, %v440
  %v872 = vmul.f32 %v869, %v450
  %v873 = vmul.f32 %v869, %v460
  %v874 = vmul.f32 %v869, %v467
  %v875 = vmul.f32 %v869, %v475
  %v876 = vmul.f32 %v869, %v485
  %v877 = vmul.f32 %v869, %v495
  %v878 = vmul.f32 %v869, %v505
  %880 = vrot.lane.b32.xlu0 %v871, 127
  %v881 = vpop.permute.xlu0 %880
  %v882 = vsel %vm515, %v512, %v881
  %884 = vrot.lane.b32.xlu0 %v872, 126
  %v885 = vpop.permute.xlu0 %884
  %v886 = vsel %vm523, %v520, %v885
  %888 = vrot.lane.b32.xlu0 %v873, 124
  %v889 = vpop.permute.xlu0 %888
  %v890 = vsel %vm531, %v528, %v889
  %892 = vrot.lane.b32.xlu0 %v874, 123
  %v893 = vpop.permute.xlu0 %892
  %895 = vrot.lane.b32.xlu0 %v875, 122
  %v896 = vpop.permute.xlu0 %895
  %v897 = vsel %vm542, %v896, %v541
  %899 = vrot.lane.b32.xlu0 %v876, 120
  %v900 = vpop.permute.xlu0 %899
  %v901 = vsel %vm550, %v900, %v549
  %903 = vrot.lane.b32.xlu0 %v877, 119
  %v904 = vpop.permute.xlu0 %903
  %v905 = vsel %vm558, %v904, %v557
  %907 = vrot.lane.b32.xlu0 %v878, 118
  %v908 = vpop.permute.xlu0 %907
  %v909 = vsel %vm566, %v908, %v565
  %v910 = vld [vmem:[%s2 + $0x18] sm:$0xff]
  %911 = vset.pattern.permute.xlu0 3
  %912 = vperm.xlu0 %911, %v341
  %v913 = vpop.permute.xlu0 %912
  %916 = vrot.lane.b32.xlu0 %v870, 5
  %v917 = vpop.permute.xlu0 %916
  %918 = vrot.lane.b32.xlu0 %v882, 5
  %v919 = vpop.permute.xlu0 %918
  %920 = vrot.lane.b32.xlu0 %v881, 5
  %v921 = vpop.permute.xlu0 %920
  %922 = vrot.lane.b32.xlu0 %v886, 5
  %v923 = vpop.permute.xlu0 %922
  %924 = vrot.lane.b32.xlu0 %v885, 5
  %v925 = vpop.permute.xlu0 %924
  %926 = vrot.lane.b32.xlu0 %v890, 5
  %v927 = vpop.permute.xlu0 %926
  %928 = vrot.lane.b32.xlu0 %v889, 5
  %v929 = vpop.permute.xlu0 %928
  %930 = vrot.lane.b32.xlu0 %v893, 5
  %v931 = vpop.permute.xlu0 %930
  %932 = vrot.lane.b32.xlu0 %v896, 5
  %v933 = vpop.permute.xlu0 %932
  %934 = vrot.lane.b32.xlu0 %v897, 5
  %v935 = vpop.permute.xlu0 %934
  %936 = vrot.lane.b32.xlu0 %v900, 5
  %v937 = vpop.permute.xlu0 %936
  %938 = vrot.lane.b32.xlu0 %v901, 5
  %v939 = vpop.permute.xlu0 %938
  %940 = vrot.lane.b32.xlu0 %v904, 5
  %v941 = vpop.permute.xlu0 %940
  %942 = vrot.lane.b32.xlu0 %v905, 5
  %v943 = vpop.permute.xlu0 %942
  %944 = vrot.lane.b32.xlu0 %v908, 5
  %v945 = vpop.permute.xlu0 %944
  %946 = vrot.lane.b32.xlu0 %v909, 5
  %v947 = vpop.permute.xlu0 %946
  %v948 = vsel %vm609, %v576, %v917
  %v949 = vsel %vm609, %v919, %v921
  %v950 = vsel %vm609, %v923, %v925
  %v951 = vsel %vm609, %v927, %v929
  %v952 = vsel %vm609, %v933, %v935
  %v953 = vsel %vm609, %v937, %v939
  %v954 = vsel %vm609, %v941, %v943
  %v955 = vsel %vm609, %v945, %v947
  %v966 = vsel %vm347, %v910, 0
  %968 = vmatprep.subr.mxu0 0.0
  %969 = vmatpush1.msra.mxu0 %v948
  %970 = vmatprep.subr.mxu0 0.0
  %971 = vmatpush1.msra.mxu0 %v949
  %972 = vmatprep.subr.mxu0 0.0
  %973 = vmatpush1.msra.mxu0 %v950
  %974 = vmatprep.subr.mxu0 0.0
  %975 = vmatpush1.msra.mxu0 %v951
  %976 = vmatprep.subr.mxu0 0.0
  %977 = vmatpush1.msra.mxu0 %v931
  %978 = vmatprep.subr.mxu0 0.0
  %979 = vmatpush1.msra.mxu0 %v952
  %980 = vmatprep.subr.mxu0 0.0
  %981 = vmatpush1.msra.mxu0 %v953
  %982 = vmatprep.subr.mxu0 0.0
  %983 = vmatpush1.msra.mxu0 %v954
  %984 = vmatprep.subr.mxu0 0.0
  %985 = vmatpush1.msra.mxu0 %v955
  %986 = vmatprep.subr.mxu0 0.0
  %987 = vmatpush1.msra.mxu0 0.0
  %988 = vmatprep.subr.mxu0 0.0
  %989 = vmatpush1.msra.mxu0 0.0
  %990 = vmatprep.subr.mxu0 0.0
  %991 = vmatpush1.msra.mxu0 0.0
  %992 = vmatprep.subr.mxu0 0.0
  %993 = vmatpush1.msra.mxu0 0.0
  %994 = vmatprep.subr.mxu0 0.0
  %995 = vmatpush1.msra.mxu0 0.0
  %996 = vmatprep.subr.mxu0 0.0
  %997 = vmatpush1.msra.mxu0 0.0
  %998 = vmatprep.subr.mxu0 0.0
  %999 = vmatpush1.msra.mxu0 0.0
  %1000 = vmatprep.subr.mxu0 0.0
  %1001 = vmatpush1.msra.mxu0 0.0
  %1002 = vmatprep.subr.mxu0 0.0
  %1003 = vmatpush1.msra.mxu0 0.0
  %1004 = vmatprep.subr.mxu0 0.0
  %1005 = vmatpush1.msra.mxu0 0.0
  %1006 = vmatprep.subr.mxu0 0.0
  %1007 = vmatpush1.msra.mxu0 0.0
  %1008 = vmatprep.subr.mxu0 0.0
  %1009 = vmatpush1.msra.mxu0 0.0
  %1010 = vmatprep.subr.mxu0 0.0
  %1011 = vmatpush1.msra.mxu0 0.0
  %1012 = vmatprep.subr.mxu0 0.0
  %1013 = vmatpush1.msra.mxu0 0.0
  %1014 = vmatprep.subr.mxu0 0.0
  %1015 = vmatpush1.msra.mxu0 0.0
  %1016 = vmatprep.subr.mxu0 0.0
  %1017 = vmatpush1.msra.mxu0 0.0
  %1018 = vmatprep.subr.mxu0 0.0
  %1019 = vmatpush1.msra.mxu0 0.0
  %1020 = vmatprep.subr.mxu0 0.0
  %1021 = vmatpush1.msra.mxu0 0.0
  %1022 = vmatprep.subr.mxu0 0.0
  %1023 = vmatpush1.msra.mxu0 0.0
  %1024 = vmatprep.subr.mxu0 0.0
  %1025 = vmatpush1.msra.mxu0 0.0
  %1026 = vmatprep.subr.mxu0 0.0
  %1027 = vmatpush1.msra.mxu0 0.0
  %1028 = vmatprep.subr.mxu0 0.0
  %1029 = vmatpush1.msra.mxu0 0.0
  %1030 = vmatprep.subr.mxu0 0.0
  %1031 = vmatpush1.msra.mxu0 0.0
  %1032 = vmatprep.mubr.f32.mxu0 0.0
  %1033 = vmatmul.mubr.f32.gmra.mrb[0].mxu0 %v966
  %v1034 = vpop.f32.mrb[0].mxu0
  %v1035 = vadd.f32 %v913, %v1034
  %v1036 = vpop.f32.mrb[0].mxu0
  %1037 = vdwg.mxu0
  %v1038 = vmax.f32 %v1035, 0.0
  %v1039 = vld [vmem:[%s2 + $0x20] sm:$0xff]
  %1040 = vset.pattern.permute.xlu0 4
  %1041 = vperm.xlu0 %1040, %v341
  %v1042 = vpop.permute.xlu0 %1041
  %vm1044 = vcmask 64512
  %v1046 = vsel %vm1044, %v1039, 0
  %1048 = vmatprep.subr.mxu0 0.0
  %1049 = vmatpush1.msra.mxu0 %v1038
  %1050 = vmatprep.subr.mxu0 0.0
  %1051 = vmatpush1.msra.mxu0 0.0
  %1052 = vmatprep.subr.mxu0 0.0
  %1053 = vmatpush1.msra.mxu0 0.0
  %1054 = vmatprep.subr.mxu0 0.0
  %1055 = vmatpush1.msra.mxu0 0.0
  %1056 = vmatprep.subr.mxu0 0.0
  %1057 = vmatpush1.msra.mxu0 0.0
  %1058 = vmatprep.subr.mxu0 0.0
  %1059 = vmatpush1.msra.mxu0 0.0
  %1060 = vmatprep.subr.mxu0 0.0
  %1061 = vmatpush1.msra.mxu0 0.0
  %1062 = vmatprep.subr.mxu0 0.0
  %1063 = vmatpush1.msra.mxu0 0.0
  %1064 = vmatprep.subr.mxu0 0.0
  %1065 = vmatpush1.msra.mxu0 0.0
  %1066 = vmatprep.subr.mxu0 0.0
  %1067 = vmatpush1.msra.mxu0 0.0
  %1068 = vmatprep.subr.mxu0 0.0
  %1069 = vmatpush1.msra.mxu0 0.0
  %1070 = vmatprep.subr.mxu0 0.0
  %1071 = vmatpush1.msra.mxu0 0.0
  %1072 = vmatprep.subr.mxu0 0.0
  %1073 = vmatpush1.msra.mxu0 0.0
  %1074 = vmatprep.subr.mxu0 0.0
  %1075 = vmatpush1.msra.mxu0 0.0
  %1076 = vmatprep.subr.mxu0 0.0
  %1077 = vmatpush1.msra.mxu0 0.0
  %1078 = vmatprep.subr.mxu0 0.0
  %1079 = vmatpush1.msra.mxu0 0.0
  %1080 = vmatprep.subr.mxu0 0.0
  %1081 = vmatpush1.msra.mxu0 0.0
  %1082 = vmatprep.subr.mxu0 0.0
  %1083 = vmatpush1.msra.mxu0 0.0
  %1084 = vmatprep.subr.mxu0 0.0
  %1085 = vmatpush1.msra.mxu0 0.0
  %1086 = vmatprep.subr.mxu0 0.0
  %1087 = vmatpush1.msra.mxu0 0.0
  %1088 = vmatprep.subr.mxu0 0.0
  %1089 = vmatpush1.msra.mxu0 0.0
  %1090 = vmatprep.subr.mxu0 0.0
  %1091 = vmatpush1.msra.mxu0 0.0
  %1092 = vmatprep.subr.mxu0 0.0
  %1093 = vmatpush1.msra.mxu0 0.0
  %1094 = vmatprep.subr.mxu0 0.0
  %1095 = vmatpush1.msra.mxu0 0.0
  %1096 = vmatprep.subr.mxu0 0.0
  %1097 = vmatpush1.msra.mxu0 0.0
  %1098 = vmatprep.subr.mxu0 0.0
  %1099 = vmatpush1.msra.mxu0 0.0
  %1100 = vmatprep.subr.mxu0 0.0
  %1101 = vmatpush1.msra.mxu0 0.0
  %1102 = vmatprep.subr.mxu0 0.0
  %1103 = vmatpush1.msra.mxu0 0.0
  %1104 = vmatprep.subr.mxu0 0.0
  %1105 = vmatpush1.msra.mxu0 0.0
  %1106 = vmatprep.subr.mxu0 0.0
  %1107 = vmatpush1.msra.mxu0 0.0
  %1108 = vmatprep.subr.mxu0 0.0
  %1109 = vmatpush1.msra.mxu0 0.0
  %1110 = vmatprep.subr.mxu0 0.0
  %1111 = vmatpush1.msra.mxu0 0.0
  %1112 = vmatprep.mubr.f32.mxu0 0.0
  %1113 = vmatmul.mubr.f32.gmra.mrb[0].mxu0 %v1046
  %v1114 = vpop.f32.mrb[0].mxu0
  %v1115 = vadd.f32 %v1042, %v1114
  %v1116 = vpop.f32.mrb[0].mxu0
  %1117 = vdwg.mxu0
  %1118 = vst [vmem:[%s5] sm:$0xff] %v1115
  // Predicated region
  $region22: #{coeffs_forward.1} parent=0 // pred_check
    _
  $region23: #{coeffs_forward.1} parent=0 // pred_check_branch
    %1120 = sbr.rel (0) target = $region25
  $region24: #{coeffs_forward.1} parent=0 // pred_region
    _
  $region25: #{coeffs_forward.1} parent=0 // pred_fallthru
    _
  // Predicated region
  $region26: #{coeffs_forward.1} parent=0 // pred_check
    _
  $region27: #{coeffs_forward.1} parent=0 // pred_check_branch
    %1122 = sbr.rel (0) target = $region29
  $region28: #{coeffs_forward.1} parent=0 // pred_region
    _
  $region29: #{coeffs_forward.1} parent=0 // pred_fallthru
    _

</llo_original>
